<compile_context>
chip_gen: v7x
topology: tpu7x:2x2x1
jax: 0.10.0
libtpu: 0.0.40
codegen_flags: <defaults>
</compile_context>

<pallas_src>
import functools

import jax
import jax.numpy as jnp
from jax.experimental import pallas as pl
from jax.experimental.pallas import tpu as pltpu


def _cbam_kernel(x_ref, w1_ref, w2_ref, o_ref, sum_acc, max_acc, *, inv_hw):
    # x_ref:  (1, t_hw, C)   w1: (C, Cr)   w2: (Cr, C)   o_ref: (1, 1, C)
    # sum_acc / max_acc: VMEM (1, C) f32, persistent across the HW-tile axis.
    s = pl.program_id(1)

    @pl.when(s == 0)
    def _init():
        sum_acc[...] = jnp.zeros_like(sum_acc)
        max_acc[...] = jnp.full_like(max_acc, -jnp.inf)

    xb = x_ref[0].astype(jnp.float32)                         # (t_hw, C)
    sum_acc[...] += jnp.sum(xb, axis=0, keepdims=True)        # (1, C) sublane reduce
    max_acc[...] = jnp.maximum(max_acc[...], jnp.max(xb, axis=0, keepdims=True))

    @pl.when(s == pl.num_programs(1) - 1)
    def _finalize():
        avg = sum_acc[...] * inv_hw                           # (1, C)
        pooled = jnp.concatenate([avg, max_acc[...]], axis=0)  # (2, C): [avg; max]
        h = jnp.maximum(
            jnp.dot(pooled, w1_ref[...], preferred_element_type=jnp.float32), 0.0
        )                                                     # (2, Cr), ReLU
        y = jnp.dot(h, w2_ref[...], preferred_element_type=jnp.float32)  # (2, C)
        logits = y[0:1, :] + y[1:2, :]                        # avg-path + max-path
        o_ref[0] = jax.nn.sigmoid(logits).astype(o_ref.dtype)


def _pick_hw_tile(hw):
    # Largest convenient spatial tile that divides HW (bounds VMEM per step and
    # keeps pipelining on large feature maps); fall back to the full extent.
    for t in (1024, 512, 256, 128, 64, 32, 16, 8):
        if hw % t == 0:
            return t
    return hw


def channel_attention_cbam(x, w1, w2, *, hw_tile=None):
    """x: (B, C, H, W).  w1: (C, Cr), w2: (Cr, C)  (transposed torch conv weights).

    Returns sigmoid channel-attention weights of shape (B, C, 1, 1)."""
    B, C, H, W = x.shape
    HW = H * W
    Cr = w1.shape[1]
    assert w1.shape == (C, Cr) and w2.shape == (Cr, C)

    t_hw = hw_tile if hw_tile is not None else _pick_hw_tile(HW)
    assert HW % t_hw == 0
    n_hw = HW // t_hw

    # Layout plumbing in the wrapper: channels on the lane axis.
    x_t = jnp.transpose(x.reshape(B, C, HW), (0, 2, 1))       # (B, HW, C)

    kernel = functools.partial(_cbam_kernel, inv_hw=1.0 / HW)

    itemsize = x.dtype.itemsize
    cost = pl.CostEstimate(
        flops=2 * B * HW * C + 2 * B * 2 * (C * Cr + Cr * C),
        transcendentals=B * C,                                 # sigmoid
        bytes_accessed=(B * HW * C + C * Cr + Cr * C + B * C) * itemsize,
    )

    out = pl.pallas_call(
        kernel,
        out_shape=jax.ShapeDtypeStruct((B, 1, C), x.dtype),
        grid_spec=pltpu.PrefetchScalarGridSpec(
            num_scalar_prefetch=0,
            grid=(B, n_hw),
            in_specs=[
                pl.BlockSpec((1, t_hw, C), lambda b, s: (b, s, 0)),
                pl.BlockSpec((C, Cr), lambda b, s: (0, 0)),
                pl.BlockSpec((Cr, C), lambda b, s: (0, 0)),
            ],
            out_specs=pl.BlockSpec((1, 1, C), lambda b, s: (b, 0, 0)),
            scratch_shapes=[
                pltpu.VMEM((1, C), jnp.float32),   # running sum
                pltpu.VMEM((1, C), jnp.float32),   # running max
            ],
        ),
        compiler_params=pltpu.CompilerParams(
            dimension_semantics=("parallel", "arbitrary"),
        ),
        cost_estimate=cost,
    )(x_t, w1, w2)

    return out.reshape(B, C, 1, 1)


if __name__ == "__main__":
    key = jax.random.PRNGKey(0)
    B, C, H, W = 2, 128, 16, 16
    reduction_ratio = 16
    Cr = C // reduction_ratio

    kx, k1, k2 = jax.random.split(key, 3)
    x = jax.random.normal(kx, (B, C, H, W), jnp.float32)
    # fc1 / fc2 are bias-free 1x1 convs == per-channel matmuls.  Weights are
    # stored transposed relative to torch's (out_ch, in_ch, 1, 1) layout.
    w1 = jax.random.normal(k1, (C, Cr), jnp.float32) * (1.0 / C) ** 0.5
    w2 = jax.random.normal(k2, (Cr, C), jnp.float32) * (1.0 / Cr) ** 0.5

    out = channel_attention_cbam(x, w1, w2)
    out = jax.block_until_ready(out)

    # pure-JAX reference
    xr = x.reshape(B, C, H * W)
    avg = jnp.mean(xr, axis=-1)                               # (B, C)
    mx = jnp.max(xr, axis=-1)                                 # (B, C)
    mlp = lambda p: jnp.maximum(p @ w1, 0.0) @ w2
    ref = jax.nn.sigmoid(mlp(avg) + mlp(mx)).reshape(B, C, 1, 1)

    assert out.shape == (B, C, 1, 1)
    assert jnp.allclose(out, ref, atol=1e-5, rtol=1e-5)

    print("KERNEL_OK")
</pallas_src>

<mosaic_0001>
module attributes {stable_mosaic.version = 11 : i64} {
  func.func @_cbam_kernel(%arg0: i32, %arg1: i32, %arg2: memref<1x256x128xf32, #tpu.memory_space<vmem>>, %arg3: memref<128x8xf32, #tpu.memory_space<vmem>>, %arg4: memref<8x128xf32, #tpu.memory_space<vmem>>, %arg5: memref<1x1x128xf32, #tpu.memory_space<vmem>>, %arg6: memref<1x128xf32, #tpu.memory_space<vmem>>, %arg7: memref<1x128xf32, #tpu.memory_space<vmem>>) attributes {dimension_semantics = [#tpu.dimension_semantics<parallel>, #tpu.dimension_semantics<arbitrary>], iteration_bounds = array<i64: 2, 1>, scalar_prefetch = 0 : i64, scratch_operands = 2 : i64, tpu.core_type = #tpu.core_type<tc>, window_params = [{transform_indices = @transform_0, window_bounds = array<i64: 1, 256, 128>}, {pipeline_mode = #tpu.pipeline_mode<synchronous>, transform_indices = @transform_1, window_bounds = array<i64: 128, 8>}, {pipeline_mode = #tpu.pipeline_mode<synchronous>, transform_indices = @transform_2, window_bounds = array<i64: 8, 128>}, {transform_indices = @transform_3, window_bounds = array<i64: 1, 1, 128>}]} {
    %c0_i32 = arith.constant 0 : i32
    %0 = arith.cmpi eq, %arg1, %c0_i32 : i32
    %1 = arith.extui %0 : i1 to i32
    %c0_i32_0 = arith.constant 0 : i32
    %2 = arith.cmpi ne, %1, %c0_i32_0 : i32
    scf.if %2 {
      %cst_14 = arith.constant 0.000000e+00 : f32
      %18 = vector.broadcast %cst_14 : f32 to vector<1x128xf32>
      %c0_15 = arith.constant 0 : index
      %c0_16 = arith.constant 0 : index
      %19 = vector.load %arg6[%c0_15, %c0_16] : memref<1x128xf32, #tpu.memory_space<vmem>>, vector<1x128xf32>
      tpu.vector_store %arg6[%c0_15, %c0_16], %18 {strides = array<i32>} : memref<1x128xf32, #tpu.memory_space<vmem>>, vector<1x128xf32>,
      %cst_17 = arith.constant 0xFF800000 : f32
      %20 = vector.broadcast %cst_17 : f32 to vector<1x128xf32>
      %c0_18 = arith.constant 0 : index
      %c0_19 = arith.constant 0 : index
      %21 = vector.load %arg7[%c0_18, %c0_19] : memref<1x128xf32, #tpu.memory_space<vmem>>, vector<1x128xf32>
      tpu.vector_store %arg7[%c0_18, %c0_19], %20 {strides = array<i32>} : memref<1x128xf32, #tpu.memory_space<vmem>>, vector<1x128xf32>,
    } else {
    }
    %c0 = arith.constant 0 : index
    %c0_1 = arith.constant 0 : index
    %c0_2 = arith.constant 0 : index
    %3 = vector.load %arg2[%c0, %c0_1, %c0_2] : memref<1x256x128xf32, #tpu.memory_space<vmem>>, vector<1x256x128xf32>
    %4 = vector.shape_cast %3 : vector<1x256x128xf32> to vector<256x128xf32>
    %c0_3 = arith.constant 0 : index
    %c0_4 = arith.constant 0 : index
    %5 = vector.load %arg6[%c0_3, %c0_4] : memref<1x128xf32, #tpu.memory_space<vmem>>, vector<1x128xf32>
    %cst = arith.constant dense<0.000000e+00> : vector<128xf32>
    %6 = vector.multi_reduction <add>, %4, %cst [0] : vector<256x128xf32> to vector<128xf32>
    %7 = vector.shape_cast %6 : vector<128xf32> to vector<1x128xf32>
    %8 = arith.addf %5, %7 : vector<1x128xf32>
    %c0_5 = arith.constant 0 : index
    %c0_6 = arith.constant 0 : index
    %9 = vector.load %arg6[%c0_5, %c0_6] : memref<1x128xf32, #tpu.memory_space<vmem>>, vector<1x128xf32>
    tpu.vector_store %arg6[%c0_5, %c0_6], %8 {strides = array<i32>} : memref<1x128xf32, #tpu.memory_space<vmem>>, vector<1x128xf32>,
    %c0_7 = arith.constant 0 : index
    %c0_8 = arith.constant 0 : index
    %10 = vector.load %arg7[%c0_7, %c0_8] : memref<1x128xf32, #tpu.memory_space<vmem>>, vector<1x128xf32>
    %cst_9 = arith.constant dense<0xFF800000> : vector<128xf32>
    %11 = vector.multi_reduction <maximumf>, %4, %cst_9 [0] : vector<256x128xf32> to vector<128xf32>
    %12 = vector.shape_cast %11 : vector<128xf32> to vector<1x128xf32>
    %13 = arith.maximumf %10, %12 : vector<1x128xf32>
    %c0_10 = arith.constant 0 : index
    %c0_11 = arith.constant 0 : index
    %14 = vector.load %arg7[%c0_10, %c0_11] : memref<1x128xf32, #tpu.memory_space<vmem>>, vector<1x128xf32>
    tpu.vector_store %arg7[%c0_10, %c0_11], %13 {strides = array<i32>} : memref<1x128xf32, #tpu.memory_space<vmem>>, vector<1x128xf32>,
    %c0_i32_12 = arith.constant 0 : i32
    %15 = arith.cmpi eq, %arg1, %c0_i32_12 : i32
    %16 = arith.extui %15 : i1 to i32
    %c0_i32_13 = arith.constant 0 : i32
    %17 = arith.cmpi ne, %16, %c0_i32_13 : i32
    scf.if %17 {
      %c0_14 = arith.constant 0 : index
      %c0_15 = arith.constant 0 : index
      %18 = vector.load %arg6[%c0_14, %c0_15] : memref<1x128xf32, #tpu.memory_space<vmem>>, vector<1x128xf32>
      %cst_16 = arith.constant 3.906250e-03 : f32
      %19 = vector.broadcast %cst_16 : f32 to vector<1x128xf32>
      %20 = arith.mulf %18, %19 : vector<1x128xf32>
      %c0_17 = arith.constant 0 : index
      %c0_18 = arith.constant 0 : index
      %21 = vector.load %arg7[%c0_17, %c0_18] : memref<1x128xf32, #tpu.memory_space<vmem>>, vector<1x128xf32>
      %22 = tpu.concatenate %20, %21 in 0 : vector<1x128xf32>, vector<1x128xf32> -> vector<2x128xf32>
      %c0_19 = arith.constant 0 : index
      %c0_20 = arith.constant 0 : index
      %23 = vector.load %arg3[%c0_19, %c0_20] : memref<128x8xf32, #tpu.memory_space<vmem>>, vector<128x8xf32>
      %cst_21 = arith.constant dense<0.000000e+00> : vector<2x8xf32>
      %24 = tpu.matmul %22, %23, %cst_21 {dimension_numbers = #tpu.dot_dimension_numbers<[1], [0], [0], [1], [0, 0, 1, 1], [], []>} : vector<2x128xf32>, vector<128x8xf32>, vector<2x8xf32> -> vector<2x8xf32>
      %cst_22 = arith.constant 0.000000e+00 : f32
      %25 = vector.broadcast %cst_22 : f32 to vector<2x8xf32>
      %26 = arith.maximumf %24, %25 : vector<2x8xf32>
      %c0_23 = arith.constant 0 : index
      %c0_24 = arith.constant 0 : index
      %27 = vector.load %arg4[%c0_23, %c0_24] : memref<8x128xf32, #tpu.memory_space<vmem>>, vector<8x128xf32>
      %cst_25 = arith.constant dense<0.000000e+00> : vector<2x128xf32>
      %28 = tpu.matmul %26, %27, %cst_25 {dimension_numbers = #tpu.dot_dimension_numbers<[1], [0], [0], [1], [0, 0, 1, 1], [], []>} : vector<2x8xf32>, vector<8x128xf32>, vector<2x128xf32> -> vector<2x128xf32>
      %29 = vector.extract_strided_slice %28 {offsets = [0, 0], sizes = [1, 128], strides = [1, 1]} : vector<2x128xf32> to vector<1x128xf32>
      %30 = vector.extract_strided_slice %28 {offsets = [1, 0], sizes = [1, 128], strides = [1, 1]} : vector<2x128xf32> to vector<1x128xf32>
      %31 = arith.addf %29, %30 : vector<1x128xf32>
      %32 = arith.negf %31 : vector<1x128xf32>
      %33 = math.exp %32 : vector<1x128xf32>
      %cst_26 = arith.constant 1.000000e+00 : f32
      %34 = vector.broadcast %cst_26 : f32 to vector<1x128xf32>
      %35 = arith.addf %34, %33 : vector<1x128xf32>
      %36 = arith.divf %34, %35 : vector<1x128xf32>
      %c0_27 = arith.constant 0 : index
      %c0_28 = arith.constant 0 : index
      %c0_29 = arith.constant 0 : index
      %37 = vector.load %arg5[%c0_27, %c0_28, %c0_29] : memref<1x1x128xf32, #tpu.memory_space<vmem>>, vector<1x1x128xf32>
      %38 = vector.shape_cast %37 : vector<1x1x128xf32> to vector<1x128xf32>
      %39 = vector.shape_cast %36 : vector<1x128xf32> to vector<1x1x128xf32>
      tpu.vector_store %arg5[%c0_27, %c0_28, %c0_29], %39 {strides = array<i32>} : memref<1x1x128xf32, #tpu.memory_space<vmem>>, vector<1x1x128xf32>,
    } else {
    }
    return
  }
  func.func @transform_0(%arg0: i32, %arg1: i32) -> (i32, i32, i32) {
    %c0_i32 = arith.constant 0 : i32
    %c0_i32_0 = arith.constant 0 : i32
    return %arg0, %arg1, %c0_i32 : i32, i32, i32
  }
  func.func @transform_1(%arg0: i32, %arg1: i32) -> (i32, i32) {
    %c0_i32 = arith.constant 0 : i32
    %c0_i32_0 = arith.constant 0 : i32
    %c0_i32_1 = arith.constant 0 : i32
    return %c0_i32, %c0_i32_0 : i32, i32
  }
  func.func @transform_2(%arg0: i32, %arg1: i32) -> (i32, i32) {
    %c0_i32 = arith.constant 0 : i32
    %c0_i32_0 = arith.constant 0 : i32
    %c0_i32_1 = arith.constant 0 : i32
    return %c0_i32, %c0_i32_0 : i32, i32
  }
  func.func @transform_3(%arg0: i32, %arg1: i32) -> (i32, i32, i32) {
    %c0_i32 = arith.constant 0 : i32
    %c0_i32_0 = arith.constant 0 : i32
    %c0_i32_1 = arith.constant 0 : i32
    return %arg0, %c0_i32, %c0_i32_0 : i32, i32, i32
  }
}

</mosaic_0001>

<llo_original>
// kernel: tpu_custom_call.1
$region0: #{tpu_custom_call.1}
  #allocation0 [shape = 'u32[]', space=smem, size = 0x4, offset = 0x4, fixed_abs, tag = 'smem constant byte address 0x4 - core index']
  #allocation1 [shape = 'u32[144,128]{1,0:T(1,128)}', space=vmem, size = 0x12000, scoped, tag = 'internal scratch']
  #allocation2 [shape = 'f32[1,128]{1,0:T(1,128)}', space=vmem, size = 0x200, scoped, tag = 'scratch operand']
  #allocation3 [shape = 'f32[1,128]{1,0:T(1,128)}', space=vmem, size = 0x200, scoped, tag = 'scratch operand']
  %s0 = inlined_call_operand.hbm [shape: f32[2,256,128], index: 0, kind: input, shape index: {}]
  %s1 = inlined_call_operand.vmem [shape: f32[128,8], index: 1, kind: input, shape index: {}]
  %s2 = inlined_call_operand.vmem [shape: f32[8,128], index: 2, kind: input, shape index: {}]
  %s3 = inlined_call_operand.hbm [shape: f32[2,1,128], index: 3, kind: output, shape index: {}]
  %s4 = sld [smem:[#allocation0]]
  $region57: #{tpu_custom_call.1} parent=0
    _
  %s6 = ssub.s32 1, %s4
  %s7 = scalar_select 0, %s6, %s4
  $region1: #{tpu_custom_call.1} parent=0
    #allocation4 [shape = 'u8[262144]{0}', space=vmem, size = 0x40000, scoped, tag = 'input window, operand 0']
    #allocation5 [shape = 's32[2]{0}', space=sflag, size = 0x8, scoped, tag = 'scoped memory for tpu_custom_call.1']
    #allocation6 [shape = 's32[2]{0}', space=sflag, size = 0x8, scoped, tag = 'scoped memory for tpu_custom_call.1']
    #allocation7 [shape = 'u8[1024]{0}', space=vmem, size = 0x400, scoped, tag = 'output window, operand 0']
    %8 = vsyncpa [#allocation5], 0
    %s9 = scalar_lea.sflag [#allocation5], 1
    %10 = vsyncpa %s9, 0
    %11 = vsyncpa [#allocation6], 0
    %s12 = scalar_lea.sflag [#allocation6], 1
    %13 = vsyncpa %s12, 0
    loop: start=0, step=1, limit=4
    $region2: #{tpu_custom_call.1} parent=1 // loop_pre_header
      _
    $region3: #{tpu_custom_call.1} parent=1 // loop_header
      %s15 = sphi 0, %s19
      %p16 = scmp.ge.s32.totalorder %s15, 4
      %s22 = sphi 0, %s34
      %s23 = sphi 0, %s30
      %s24 = sphi 0, %s22
      %s25 = sphi 0, %s23
      %s26 = sphi 0, %s24
      %s27 = sphi 0, %s25
      %s39 = sphi 0, %s41
      %s42 = sphi 0, %s39
      %s43 = sphi 0, %s42
      %s59 = sphi 0, %s43
      %s63 = sphi 0, %s63
      %s65 = sphi 0, %s63
      %s66 = sphi 0, %s65
      %s80 = sphi 0, %s66
      %s84 = sphi 0, %s84
      %s86 = sphi 0, %s84
      %s87 = sphi 0, %s86
      %s101 = sphi 0, %s87
      %s107 = sphi 0, %s109
      %s110 = sphi 0, %s107
      %s111 = sphi 0, %s110
      %s127 = sphi 0, %s111
    $region4: #{tpu_custom_call.1} parent=1 // loop_header_branch
      %18 = sbr.rel (%p16) target = $region8
    $region5: #{tpu_custom_call.1} parent=1 // loop_body
      %s20 = ssub.s32 %s15, 1
      %s21 = ssub.s32 %s15, 2
      %s28 = sadd.s32 1, %s23
      %p29 = scmp.ge.s32.totalorder %s28, 1
      %s30 = scalar_select %p29, 0, %s28
      %s31 = sadd.s32 1, %s22
      %s32 = scalar_select %p29, %s31, %s22
      %p33 = scmp.ge.s32.totalorder %s32, 2
      %s34 = scalar_select %p33, 0, %s32
      %s35 = ssub.s32 %s22, %s34
      %s36 = ssub.s32 %s23, %s30
      %s37 = sor.u32 %s35, %s36
      %p38 = scmp.eq.s32.totalorder %s37, 0
      %s40 = sadd.s32 %s39, 1
      %s41 = scalar_select %p38, %s39, %s40
      %p44 = pneg %p38
      %p45 = scmp.eq.s32.totalorder %s15, 1
      %p46 = por %p44, %p45
      %p47 = scmp.ne.s32.totalorder %s39, %s42
      %p48 = scmp.eq.s32.totalorder %s15, 0
      %p49 = por %p47, %p48
      %p50 = scmp.ne.s32.totalorder %s39, %s42
      %p51 = scmp.eq.s32.totalorder %s20, 1
      %p52 = por %p50, %p51
      %p53 = scmp.ne.s32.totalorder %s42, %s43
      %p54 = scmp.eq.s32.totalorder %s20, 0
      %p55 = por %p53, %p54
      %p56 = scmp.ne.s32.totalorder %s42, %s43
      %p57 = scmp.eq.s32.totalorder %s21, 1
      %p58 = por %p56, %p57
      %p60 = scmp.ne.s32.totalorder %s43, %s59
      %p61 = scmp.eq.s32.totalorder %s21, 0
      %p62 = por %p60, %p61
      %s64 = sadd.s32 %s63, 1
      %p67 = scmp.eq.s32.totalorder %s15, 1
      %p68 = scmp.ne.s32.totalorder %s63, %s65
      %p69 = scmp.eq.s32.totalorder %s15, 0
      %p70 = por %p68, %p69
      %p71 = scmp.ne.s32.totalorder %s63, %s65
      %p72 = scmp.eq.s32.totalorder %s20, 1
      %p73 = por %p71, %p72
      %p74 = scmp.ne.s32.totalorder %s65, %s66
      %p75 = scmp.eq.s32.totalorder %s20, 0
      %p76 = por %p74, %p75
      %p77 = scmp.ne.s32.totalorder %s65, %s66
      %p78 = scmp.eq.s32.totalorder %s21, 1
      %p79 = por %p77, %p78
      %p81 = scmp.ne.s32.totalorder %s66, %s80
      %p82 = scmp.eq.s32.totalorder %s21, 0
      %p83 = por %p81, %p82
      %s85 = sadd.s32 %s84, 1
      %p88 = scmp.eq.s32.totalorder %s15, 1
      %p89 = scmp.ne.s32.totalorder %s84, %s86
      %p90 = scmp.eq.s32.totalorder %s15, 0
      %p91 = por %p89, %p90
      %p92 = scmp.ne.s32.totalorder %s84, %s86
      %p93 = scmp.eq.s32.totalorder %s20, 1
      %p94 = por %p92, %p93
      %p95 = scmp.ne.s32.totalorder %s86, %s87
      %p96 = scmp.eq.s32.totalorder %s20, 0
      %p97 = por %p95, %p96
      %p98 = scmp.ne.s32.totalorder %s86, %s87
      %p99 = scmp.eq.s32.totalorder %s21, 1
      %p100 = por %p98, %p99
      %p102 = scmp.ne.s32.totalorder %s87, %s101
      %p103 = scmp.eq.s32.totalorder %s21, 0
      %p104 = por %p102, %p103
      %s105 = ssub.s32 %s22, %s34
      %p106 = scmp.eq.s32.totalorder %s105, 0
      %s108 = sadd.s32 %s107, 1
      %s109 = scalar_select %p106, %s107, %s108
      %p112 = pneg %p106
      %p113 = scmp.eq.s32.totalorder %s15, 1
      %p114 = por %p112, %p113
      %p115 = scmp.ne.s32.totalorder %s107, %s110
      %p116 = scmp.eq.s32.totalorder %s15, 0
      %p117 = por %p115, %p116
      %p118 = scmp.ne.s32.totalorder %s107, %s110
      %p119 = scmp.eq.s32.totalorder %s20, 1
      %p120 = por %p118, %p119
      %p121 = scmp.ne.s32.totalorder %s110, %s111
      %p122 = scmp.eq.s32.totalorder %s20, 0
      %p123 = por %p121, %p122
      %p124 = scmp.ne.s32.totalorder %s110, %s111
      %p125 = scmp.eq.s32.totalorder %s21, 1
      %p126 = por %p124, %p125
      %p128 = scmp.ne.s32.totalorder %s111, %s127
      %p129 = scmp.eq.s32.totalorder %s21, 0
      %p130 = por %p128, %p129
      %p131 = scmp.le.s32.totalorder 1, %s15
      %p132 = scmp.lt.s32.totalorder %s15, 3
      %p133 = pnand %p131, %p132
      %p134 = pneg %p133
      // Predicated region
      $region9: #{tpu_custom_call.1} parent=5 // pred_check
        _
      $region10: #{tpu_custom_call.1} parent=5 // pred_check_branch
        %136 = sbr.rel (%p133) target = $region12
      $region11: #{tpu_custom_call.1} parent=5 // pred_region
        %s137 = ssub.s32 %s15, 1
        // Predicated region
        $region13: #{tpu_custom_call.1} parent=11 // pred_check
          %p138 = pneg %p76
        $region14: #{tpu_custom_call.1} parent=11 // pred_check_branch
          %140 = sbr.rel (%p138) target = $region16
        $region15: #{tpu_custom_call.1} parent=11 // pred_region
          _
        $region16: #{tpu_custom_call.1} parent=11 // pred_fallthru
          _
        // Predicated region
        $region17: #{tpu_custom_call.1} parent=11 // pred_check
          %p141 = pneg %p97
        $region18: #{tpu_custom_call.1} parent=11 // pred_check_branch
          %143 = sbr.rel (%p141) target = $region20
        $region19: #{tpu_custom_call.1} parent=11 // pred_region
          _
        $region20: #{tpu_custom_call.1} parent=11 // pred_fallthru
          _
      $region12: #{tpu_custom_call.1} parent=5 // pred_fallthru
        _
      %p144 = scmp.lt.s32.totalorder %s15, 2
      // Predicated region
      $region21: #{tpu_custom_call.1} parent=5 // pred_check
        %p145 = pneg %p144
      $region22: #{tpu_custom_call.1} parent=5 // pred_check_branch
        %147 = sbr.rel (%p145) target = $region24
      $region23: #{tpu_custom_call.1} parent=5 // pred_region
        // Predicated region
        $region25: #{tpu_custom_call.1} parent=23 // pred_check
          %p148 = pneg %p49
        $region26: #{tpu_custom_call.1} parent=23 // pred_check_branch
          %150 = sbr.rel (%p148) target = $region28
        $region27: #{tpu_custom_call.1} parent=23 // pred_region
          %s151 = sand.u32 %s39, 1
          %s152 = scalar_lea.sflag [#allocation5], %s151
          %s153 = sand.u32 %s39, 1
          %s154 = smul.addr %s153, 256
          %s155 = scalar_lea.vmem [#allocation4], %s154
          %s156 = smul.u32 32, %s23
          %s158 = ssub.s32 4096, 4096
          %159 = vsyncadd %s152, %s158
          %s160 = smul.addr %s22, 32
          %s161 = sadd.s32 %s156, %s160
          %s162 = smul.addr %s161, 128
          %s163 = scalar_lea.hbm %s0, %s162
          %s164 = sshll.u32 %s155, 4
          %s165 = int_to_ptr.vmem [resolvable:$true] %s164
          %170 = dma.hbm_to_vmem [thread:$0]  %s163, 4096, %s165, %s152, 128, 128, 8
        $region28: #{tpu_custom_call.1} parent=23 // pred_fallthru
          _
      $region24: #{tpu_custom_call.1} parent=5 // pred_fallthru
        _
      %p171 = scmp.le.s32.totalorder 1, %s15
      %p172 = scmp.lt.s32.totalorder %s15, 3
      %p173 = pnand %p171, %p172
      %p174 = pneg %p173
      // Predicated region
      $region29: #{tpu_custom_call.1} parent=5 // pred_check
        _
      $region30: #{tpu_custom_call.1} parent=5 // pred_check_branch
        %176 = sbr.rel (%p173) target = $region32
      $region31: #{tpu_custom_call.1} parent=5 // pred_region
        %s177 = ssub.s32 %s15, 1
        %s178 = sand.u32 %s42, 1
        %s179 = scalar_lea.sflag [#allocation5], %s178
        %s180 = sand.u32 %s42, 1
        %s181 = smul.addr %s180, 256
        %s182 = scalar_lea.vmem [#allocation4], %s181
        // Predicated region
        $region33: #{tpu_custom_call.1} parent=31 // pred_check
          %p183 = pneg %p55
        $region34: #{tpu_custom_call.1} parent=31 // pred_check_branch
          %185 = sbr.rel (%p183) target = $region36
        $region35: #{tpu_custom_call.1} parent=31 // pred_region
          %186 = dma.done %s179, 4096
        $region36: #{tpu_custom_call.1} parent=31 // pred_fallthru
          _
        %s187 = sand.u32 %s42, 1
        %s188 = scalar_lea.sflag [#allocation5], %s187
        %s189 = sand.u32 %s42, 1
        %s190 = smul.addr %s189, 256
        %s191 = scalar_lea.vmem [#allocation4], %s190
        %p192 = pneg %p55
        %p193 = pneg %p52
        %p194 = pneg %p76
        %p195 = pneg %p73
        %p196 = pneg %p97
        %p197 = pneg %p94
        %p198 = pneg %p123
        %p199 = pneg %p120
        %s200 = sand.u32 %s110, 1
        %s201 = scalar_lea.sflag [#allocation6], %s200
        %s202 = sand.u32 %s110, 1
        %s203 = scalar_lea.vmem [#allocation7], %s202
        %s204 = smul.u32 32, %s25
        %p205 = scmp.eq.s32.totalorder %s25, 0
        // Predicated region
        $region37: #{tpu_custom_call.1} parent=31 // pred_check
          %p206 = pneg %p205
        $region38: #{tpu_custom_call.1} parent=31 // pred_check_branch
          %208 = sbr.rel (%p206) target = $region40
        $region39: #{tpu_custom_call.1} parent=31 // pred_region
          %209 = vst [vmem:[#allocation2] sm:$0x1] 0.0
          %210 = vst [vmem:[#allocation3] sm:$0x1] -inf
        $region40: #{tpu_custom_call.1} parent=31 // pred_fallthru
          _
        %v211 = vld [vmem:[%s182] sm:$0xff]
        %v212 = vld [vmem:[%s182 + $0x8] sm:$0xff]
        %v213 = vld [vmem:[%s182 + $0x10] sm:$0xff]
        %v214 = vld [vmem:[%s182 + $0x18] sm:$0xff]
        %v215 = vld [vmem:[%s182 + $0x20] sm:$0xff]
        %v216 = vld [vmem:[%s182 + $0x28] sm:$0xff]
        %v217 = vld [vmem:[%s182 + $0x30] sm:$0xff]
        %v218 = vld [vmem:[%s182 + $0x38] sm:$0xff]
        %v219 = vld [vmem:[%s182 + $0x40] sm:$0xff]
        %v220 = vld [vmem:[%s182 + $0x48] sm:$0xff]
        %v221 = vld [vmem:[%s182 + $0x50] sm:$0xff]
        %v222 = vld [vmem:[%s182 + $0x58] sm:$0xff]
        %v223 = vld [vmem:[%s182 + $0x60] sm:$0xff]
        %v224 = vld [vmem:[%s182 + $0x68] sm:$0xff]
        %v225 = vld [vmem:[%s182 + $0x70] sm:$0xff]
        %v226 = vld [vmem:[%s182 + $0x78] sm:$0xff]
        %v227 = vld [vmem:[%s182 + $0x80] sm:$0xff]
        %v228 = vld [vmem:[%s182 + $0x88] sm:$0xff]
        %v229 = vld [vmem:[%s182 + $0x90] sm:$0xff]
        %v230 = vld [vmem:[%s182 + $0x98] sm:$0xff]
        %v231 = vld [vmem:[%s182 + $0xa0] sm:$0xff]
        %v232 = vld [vmem:[%s182 + $0xa8] sm:$0xff]
        %v233 = vld [vmem:[%s182 + $0xb0] sm:$0xff]
        %v234 = vld [vmem:[%s182 + $0xb8] sm:$0xff]
        %v235 = vld [vmem:[%s182 + $0xc0] sm:$0xff]
        %v236 = vld [vmem:[%s182 + $0xc8] sm:$0xff]
        %v237 = vld [vmem:[%s182 + $0xd0] sm:$0xff]
        %v238 = vld [vmem:[%s182 + $0xd8] sm:$0xff]
        %v239 = vld [vmem:[%s182 + $0xe0] sm:$0xff]
        %v240 = vld [vmem:[%s182 + $0xe8] sm:$0xff]
        %v241 = vld [vmem:[%s182 + $0xf0] sm:$0xff]
        %v242 = vld [vmem:[%s182 + $0xf8] sm:$0xff]
        %v243 = vld [vmem:[#allocation2] sm:$0x1]
        %v244 = vadd.f32 %v211, %v212
        %v245 = vadd.f32 %v244, %v213
        %v246 = vadd.f32 %v245, %v214
        %v247 = vadd.f32 %v246, %v215
        %v248 = vadd.f32 %v247, %v216
        %v249 = vadd.f32 %v248, %v217
        %v250 = vadd.f32 %v249, %v218
        %v251 = vadd.f32 %v250, %v219
        %v252 = vadd.f32 %v251, %v220
        %v253 = vadd.f32 %v252, %v221
        %v254 = vadd.f32 %v253, %v222
        %v255 = vadd.f32 %v254, %v223
        %v256 = vadd.f32 %v255, %v224
        %v257 = vadd.f32 %v256, %v225
        %v258 = vadd.f32 %v257, %v226
        %v259 = vadd.f32 %v258, %v227
        %v260 = vadd.f32 %v259, %v228
        %v261 = vadd.f32 %v260, %v229
        %v262 = vadd.f32 %v261, %v230
        %v263 = vadd.f32 %v262, %v231
        %v264 = vadd.f32 %v263, %v232
        %v265 = vadd.f32 %v264, %v233
        %v266 = vadd.f32 %v265, %v234
        %v267 = vadd.f32 %v266, %v235
        %v268 = vadd.f32 %v267, %v236
        %v269 = vadd.f32 %v268, %v237
        %v270 = vadd.f32 %v269, %v238
        %v271 = vadd.f32 %v270, %v239
        %v272 = vadd.f32 %v271, %v240
        %v273 = vadd.f32 %v272, %v241
        %v274 = vadd.f32 %v273, %v242
        %v275 = vrot.slane %v274, 4
        %v276 = vadd.f32 %v274, %v275
        %v277 = vrot.slane %v276, 2
        %v278 = vadd.f32 %v276, %v277
        %v279 = vrot.slane %v278, 1
        %v280 = vadd.f32 %v278, %v279
        %v281 = vadd.f32 %v243, %v280
        %282 = vst [vmem:[#allocation2] sm:$0x1] %v281
        %v283 = vld [vmem:[#allocation3] sm:$0x1]
        %v284 = vmax.f32 %v211, %v215
        %v285 = vmax.f32 %v212, %v216
        %v286 = vmax.f32 %v213, %v217
        %v287 = vmax.f32 %v214, %v218
        %v288 = vmax.f32 %v284, %v219
        %v289 = vmax.f32 %v285, %v220
        %v290 = vmax.f32 %v286, %v221
        %v291 = vmax.f32 %v287, %v222
        %v292 = vmax.f32 %v288, %v223
        %v293 = vmax.f32 %v289, %v224
        %v294 = vmax.f32 %v290, %v225
        %v295 = vmax.f32 %v291, %v226
        %v296 = vmax.f32 %v292, %v227
        %v297 = vmax.f32 %v293, %v228
        %v298 = vmax.f32 %v294, %v229
        %v299 = vmax.f32 %v295, %v230
        %v300 = vmax.f32 %v296, %v231
        %v301 = vmax.f32 %v297, %v232
        %v302 = vmax.f32 %v298, %v233
        %v303 = vmax.f32 %v299, %v234
        %v304 = vmax.f32 %v300, %v235
        %v305 = vmax.f32 %v301, %v236
        %v306 = vmax.f32 %v302, %v237
        %v307 = vmax.f32 %v303, %v238
        %v308 = vmax.f32 %v304, %v239
        %v309 = vmax.f32 %v305, %v240
        %v310 = vmax.f32 %v306, %v241
        %v311 = vmax.f32 %v307, %v242
        %v312 = vmax.f32 %v308, %v309
        %v313 = vmax.f32 %v310, %v311
        %v314 = vmax.f32 %v312, %v313
        %v315 = vrot.slane %v314, 4
        %v316 = vmax.f32 %v314, %v315
        %v317 = vrot.slane %v316, 2
        %v318 = vmax.f32 %v316, %v317
        %v319 = vrot.slane %v318, 1
        %v320 = vmax.f32 %v318, %v319
        %v321 = vmax.f32 %v283, %v320
        %322 = vst [vmem:[#allocation3] sm:$0x1] %v321
        // Predicated region
        $region41: #{tpu_custom_call.1} parent=31 // pred_check
          %p323 = pneg %p205
        $region42: #{tpu_custom_call.1} parent=31 // pred_check_branch
          %325 = sbr.rel (%p323) target = $region44
        $region43: #{tpu_custom_call.1} parent=31 // pred_region
          %v326 = vld [vmem:[#allocation2] sm:$0x1]
          %v327 = vmul.f32 %v326, 0.00390625
          %v328 = vld [vmem:[#allocation3] sm:$0x1]
          %v330 = vlaneseq
          %v331 = vshrl.u32 %v330, 7
          %v332 = vsub.s32 0, %v331
          %v333 = vrot.slane %v328, %v332
          %vm335 = vcmask 1040384
          %v336 = vsel %vm335, %v327, %v333
          %v337 = vld [vmem:[%s1] sm:$0xff]
          %v338 = vld [vmem:[%s1 + $0x8] sm:$0xff]
          %v339 = vld [vmem:[%s1 + $0x10] sm:$0xff]
          %v340 = vld [vmem:[%s1 + $0x18] sm:$0xff]
          %v341 = vld [vmem:[%s1 + $0x20] sm:$0xff]
          %v342 = vld [vmem:[%s1 + $0x28] sm:$0xff]
          %v343 = vld [vmem:[%s1 + $0x30] sm:$0xff]
          %v344 = vld [vmem:[%s1 + $0x38] sm:$0xff]
          %v345 = vld [vmem:[%s1 + $0x40] sm:$0xff]
          %v346 = vld [vmem:[%s1 + $0x48] sm:$0xff]
          %v347 = vld [vmem:[%s1 + $0x50] sm:$0xff]
          %v348 = vld [vmem:[%s1 + $0x58] sm:$0xff]
          %v349 = vld [vmem:[%s1 + $0x60] sm:$0xff]
          %v350 = vld [vmem:[%s1 + $0x68] sm:$0xff]
          %v351 = vld [vmem:[%s1 + $0x70] sm:$0xff]
          %v352 = vld [vmem:[%s1 + $0x78] sm:$0xff]
          %353 = vmatprep.subr.mxu0 0.0
          %354 = vmatpush1.msra.mxu0 %v337
          %355 = vmatprep.subr.mxu0 0.0
          %356 = vmatpush1.msra.mxu0 %v338
          %357 = vmatprep.subr.mxu0 0.0
          %358 = vmatpush1.msra.mxu0 %v339
          %359 = vmatprep.subr.mxu0 0.0
          %360 = vmatpush1.msra.mxu0 %v340
          %361 = vmatprep.subr.mxu0 0.0
          %362 = vmatpush1.msra.mxu0 %v341
          %363 = vmatprep.subr.mxu0 0.0
          %364 = vmatpush1.msra.mxu0 %v342
          %365 = vmatprep.subr.mxu0 0.0
          %366 = vmatpush1.msra.mxu0 %v343
          %367 = vmatprep.subr.mxu0 0.0
          %368 = vmatpush1.msra.mxu0 %v344
          %369 = vmatprep.subr.mxu0 0.0
          %370 = vmatpush1.msra.mxu0 %v345
          %371 = vmatprep.subr.mxu0 0.0
          %372 = vmatpush1.msra.mxu0 %v346
          %373 = vmatprep.subr.mxu0 0.0
          %374 = vmatpush1.msra.mxu0 %v347
          %375 = vmatprep.subr.mxu0 0.0
          %376 = vmatpush1.msra.mxu0 %v348
          %377 = vmatprep.subr.mxu0 0.0
          %378 = vmatpush1.msra.mxu0 %v349
          %379 = vmatprep.subr.mxu0 0.0
          %380 = vmatpush1.msra.mxu0 %v350
          %381 = vmatprep.subr.mxu0 0.0
          %382 = vmatpush1.msra.mxu0 %v351
          %383 = vmatprep.subr.mxu0 0.0
          %384 = vmatpush1.msra.mxu0 %v352
          %385 = vmatprep.subr.mxu0 0.0
          %386 = vmatpush1.msra.mxu0 0.0
          %387 = vmatprep.subr.mxu0 0.0
          %388 = vmatpush1.msra.mxu0 0.0
          %389 = vmatprep.subr.mxu0 0.0
          %390 = vmatpush1.msra.mxu0 0.0
          %391 = vmatprep.subr.mxu0 0.0
          %392 = vmatpush1.msra.mxu0 0.0
          %393 = vmatprep.subr.mxu0 0.0
          %394 = vmatpush1.msra.mxu0 0.0
          %395 = vmatprep.subr.mxu0 0.0
          %396 = vmatpush1.msra.mxu0 0.0
          %397 = vmatprep.subr.mxu0 0.0
          %398 = vmatpush1.msra.mxu0 0.0
          %399 = vmatprep.subr.mxu0 0.0
          %400 = vmatpush1.msra.mxu0 0.0
          %401 = vmatprep.subr.mxu0 0.0
          %402 = vmatpush1.msra.mxu0 0.0
          %403 = vmatprep.subr.mxu0 0.0
          %404 = vmatpush1.msra.mxu0 0.0
          %405 = vmatprep.subr.mxu0 0.0
          %406 = vmatpush1.msra.mxu0 0.0
          %407 = vmatprep.subr.mxu0 0.0
          %408 = vmatpush1.msra.mxu0 0.0
          %409 = vmatprep.subr.mxu0 0.0
          %410 = vmatpush1.msra.mxu0 0.0
          %411 = vmatprep.subr.mxu0 0.0
          %412 = vmatpush1.msra.mxu0 0.0
          %413 = vmatprep.subr.mxu0 0.0
          %414 = vmatpush1.msra.mxu0 0.0
          %415 = vmatprep.subr.mxu0 0.0
          %416 = vmatpush1.msra.mxu0 0.0
          %417 = vmatprep.mubr.f32.mxu0 0.0
          %418 = vmatmul.mubr.f32.gmra.mrb[0].mxu0 %v336
          %v419 = vpop.f32.mrb[0].mxu0
          %v420 = vadd.f32 0.0, %v419
          %v421 = vpop.f32.mrb[0].mxu0
          %422 = vdwg.mxu0
          %v423 = vmax.f32 %v420, 0.0
          %v424 = vld [vmem:[%s2] sm:$0xff]
          %vm425 = vcmask 64512
          %v427 = vsel %vm425, %v423, 0
          %429 = vmatprep.subr.mxu0 0.0
          %430 = vmatpush1.msra.mxu0 %v424
          %431 = vmatprep.subr.mxu0 0.0
          %432 = vmatpush1.msra.mxu0 0.0
          %433 = vmatprep.subr.mxu0 0.0
          %434 = vmatpush1.msra.mxu0 0.0
          %435 = vmatprep.subr.mxu0 0.0
          %436 = vmatpush1.msra.mxu0 0.0
          %437 = vmatprep.subr.mxu0 0.0
          %438 = vmatpush1.msra.mxu0 0.0
          %439 = vmatprep.subr.mxu0 0.0
          %440 = vmatpush1.msra.mxu0 0.0
          %441 = vmatprep.subr.mxu0 0.0
          %442 = vmatpush1.msra.mxu0 0.0
          %443 = vmatprep.subr.mxu0 0.0
          %444 = vmatpush1.msra.mxu0 0.0
          %445 = vmatprep.subr.mxu0 0.0
          %446 = vmatpush1.msra.mxu0 0.0
          %447 = vmatprep.subr.mxu0 0.0
          %448 = vmatpush1.msra.mxu0 0.0
          %449 = vmatprep.subr.mxu0 0.0
          %450 = vmatpush1.msra.mxu0 0.0
          %451 = vmatprep.subr.mxu0 0.0
          %452 = vmatpush1.msra.mxu0 0.0
          %453 = vmatprep.subr.mxu0 0.0
          %454 = vmatpush1.msra.mxu0 0.0
          %455 = vmatprep.subr.mxu0 0.0
          %456 = vmatpush1.msra.mxu0 0.0
          %457 = vmatprep.subr.mxu0 0.0
          %458 = vmatpush1.msra.mxu0 0.0
          %459 = vmatprep.subr.mxu0 0.0
          %460 = vmatpush1.msra.mxu0 0.0
          %461 = vmatprep.subr.mxu0 0.0
          %462 = vmatpush1.msra.mxu0 0.0
          %463 = vmatprep.subr.mxu0 0.0
          %464 = vmatpush1.msra.mxu0 0.0
          %465 = vmatprep.subr.mxu0 0.0
          %466 = vmatpush1.msra.mxu0 0.0
          %467 = vmatprep.subr.mxu0 0.0
          %468 = vmatpush1.msra.mxu0 0.0
          %469 = vmatprep.subr.mxu0 0.0
          %470 = vmatpush1.msra.mxu0 0.0
          %471 = vmatprep.subr.mxu0 0.0
          %472 = vmatpush1.msra.mxu0 0.0
          %473 = vmatprep.subr.mxu0 0.0
          %474 = vmatpush1.msra.mxu0 0.0
          %475 = vmatprep.subr.mxu0 0.0
          %476 = vmatpush1.msra.mxu0 0.0
          %477 = vmatprep.subr.mxu0 0.0
          %478 = vmatpush1.msra.mxu0 0.0
          %479 = vmatprep.subr.mxu0 0.0
          %480 = vmatpush1.msra.mxu0 0.0
          %481 = vmatprep.subr.mxu0 0.0
          %482 = vmatpush1.msra.mxu0 0.0
          %483 = vmatprep.subr.mxu0 0.0
          %484 = vmatpush1.msra.mxu0 0.0
          %485 = vmatprep.subr.mxu0 0.0
          %486 = vmatpush1.msra.mxu0 0.0
          %487 = vmatprep.subr.mxu0 0.0
          %488 = vmatpush1.msra.mxu0 0.0
          %489 = vmatprep.subr.mxu0 0.0
          %490 = vmatpush1.msra.mxu0 0.0
          %491 = vmatprep.subr.mxu0 0.0
          %492 = vmatpush1.msra.mxu0 0.0
          %493 = vmatprep.mubr.f32.mxu0 0.0
          %494 = vmatmul.mubr.f32.gmra.mrb[0].mxu0 %v427
          %v495 = vpop.f32.mrb[0].mxu0
          %v496 = vadd.f32 0.0, %v495
          %v497 = vpop.f32.mrb[0].mxu0
          %498 = vdwg.mxu0
          %v500 = vrot.slane %v496, 1
          %v502 = vadd.f32 %v496, %v500
          %v503 = vxor.u32 %v502, 2147483648
          %v504 = vmul.f32 %v503, 1.442695
          %v505 = vpow.pop %v504
          %v506 = vadd.f32 %v505, 1.0
          %v507 = vrcp.pop %v506
          %v508 = vmul.f32 1.0, %v507
          %509 = vst [vmem:[%s203] sm:$0x1] %v508
        $region44: #{tpu_custom_call.1} parent=31 // pred_fallthru
          _
        %s510 = sand.u32 %s110, 1
        %s511 = scalar_lea.sflag [#allocation6], %s510
        %s512 = sand.u32 %s110, 1
        %s513 = scalar_lea.vmem [#allocation7], %s512
        // Predicated region
        $region45: #{tpu_custom_call.1} parent=31 // pred_check
          %p514 = pneg %p120
        $region46: #{tpu_custom_call.1} parent=31 // pred_check_branch
          %516 = sbr.rel (%p514) target = $region48
        $region47: #{tpu_custom_call.1} parent=31 // pred_region
          %s518 = ssub.s32 16, 16
          %519 = vsyncadd %s511, %s518
          %s520 = smul.addr %s24, 16
          %s521 = scalar_lea.hbm %s3, %s520
          %s523 = sshll.u32 %s513, 4
          %s524 = int_to_ptr.vmem [resolvable:$true] %s523
          %526 = dma.vmem_to_hbm [thread:$0]  %s524, 16, %s521, %s511
        $region48: #{tpu_custom_call.1} parent=31 // pred_fallthru
          _
      $region32: #{tpu_custom_call.1} parent=5 // pred_fallthru
        _
      %p527 = scmp.le.s32.totalorder 2, %s15
      // Predicated region
      $region49: #{tpu_custom_call.1} parent=5 // pred_check
        %p528 = pneg %p527
      $region50: #{tpu_custom_call.1} parent=5 // pred_check_branch
        %530 = sbr.rel (%p528) target = $region52
      $region51: #{tpu_custom_call.1} parent=5 // pred_region
        %s531 = ssub.s32 %s15, 2
        // Predicated region
        $region53: #{tpu_custom_call.1} parent=51 // pred_check
          %p532 = pneg %p126
        $region54: #{tpu_custom_call.1} parent=51 // pred_check_branch
          %534 = sbr.rel (%p532) target = $region56
        $region55: #{tpu_custom_call.1} parent=51 // pred_region
          %s535 = sand.u32 %s111, 1
          %s536 = scalar_lea.sflag [#allocation6], %s535
          %s537 = sand.u32 %s111, 1
          %s538 = scalar_lea.vmem [#allocation7], %s537
          %539 = dma.done %s536, 16
        $region56: #{tpu_custom_call.1} parent=51 // pred_fallthru
          _
      $region52: #{tpu_custom_call.1} parent=5 // pred_fallthru
        _
    $region6: #{tpu_custom_call.1} parent=1 // loop_footer
      %s19 = sadd.s32 1, %s15
    $region7: #{tpu_custom_call.1} parent=1 // loop_footer_branch
      %14 = sbr.rel target = $region3
    $region8: #{tpu_custom_call.1} parent=1 // loop_exit
      _
    %540 = vsyncpa [#allocation5], 1
    %s541 = scalar_lea.sflag [#allocation5], 1
    %542 = vsyncpa %s541, 1
    %543 = vsyncpa [#allocation6], 1
    %s544 = scalar_lea.sflag [#allocation6], 1
    %545 = vsyncpa %s544, 1

</llo_original>
